<compile_context>
chip_gen: v6e
topology: v6e:2x2x1
jax: 0.10.0
libtpu: 0.0.40
codegen_flags: <defaults>
</compile_context>

<pallas_src>
import functools

import jax
import jax.numpy as jnp
from jax.experimental import pallas as pl
from jax.experimental.pallas import tpu as pltpu


_LANES = 128
_MAX_BLOCK_ROWS = 2048  # 2048 rows * 128 lanes / 4 coords = 65536 boxes/step


def _cdiv(a, b):
    return -(-a // b)


def _iou_loss_kernel(pred_ref, targ_ref, *rest, loc_loss_type, block_r, steps,
                     total_chunks, n_boxes, needs_tail_mask, has_weight):
    if has_weight:
        w_ref, out_ref, acc_l_ref, acc_lw_ref, acc_w_ref = rest
    else:
        out_ref, acc_l_ref = rest
        w_ref = acc_lw_ref = acc_w_ref = None

    split = pl.program_id(0)
    step = pl.program_id(1)

    @pl.when(step == 0)
    def _():
        acc_l_ref[...] = jnp.zeros_like(acc_l_ref)
        if has_weight:
            acc_lw_ref[...] = jnp.zeros_like(acc_lw_ref)
            acc_w_ref[...] = jnp.zeros_like(acc_w_ref)

    # Lane rotations (direction-convention agnostic usage, see mask below).
    def sh1(v):
        return pltpu.roll(v, 127, 1)

    def sh2(v):
        return pltpu.roll(v, 126, 1)

    def sh3(v):
        return pltpu.roll(v, 125, 1)

    # Interleaved coordinate planes: lanes repeat [l, t, r, b] per box.
    x = pred_ref[...].astype(jnp.float32)
    y = targ_ref[...].astype(jnp.float32)

    # Pair sums (l+r) / (t+b) land on adjacent lanes; products of adjacent
    # pair sums give per-box areas on one lane of each 4-lane group.
    sx = x + sh2(x)
    sy = y + sh2(y)
    mn = jnp.minimum(x, y)
    sm = mn + sh2(mn)

    pred_area = sx * sh1(sx)
    target_area = sy * sh1(sy)
    area_intersect = sm * sh1(sm)
    area_union = target_area + pred_area - area_intersect
    ious = (area_intersect + 1.0) / (area_union + 1.0)

    if loc_loss_type == 'iou':
        loss = -jnp.log(ious)
    elif loc_loss_type == 'giou':
        mx = jnp.maximum(x, y)
        sg = mx + sh2(mx)
        g_intersect = sg * sh1(sg) + 1e-07
        gious = ious - (g_intersect - area_union) / g_intersect
        loss = 1.0 - gious
    else:
        raise ValueError(f"unknown loc_loss_type: {loc_loss_type}")

    # A lane holds a valid per-box loss iff every lane it gathered from (via
    # sh1/sh2/sh3-composed shifts) belongs to the same 4-lane box group.
    # Built with the same rolls as the data, so it is correct regardless of
    # the rotation direction convention.
    lane = jax.lax.broadcasted_iota(jnp.int32, (1, _LANES), 1)
    gid = lane >> 2
    lane_keep = (gid == sh1(gid)) & (gid == sh2(gid)) & (gid == sh3(gid))

    if has_weight:
        w = w_ref[...].astype(jnp.float32)

    def accumulate(keep):
        acc_l_ref[...] += jnp.where(keep, loss, 0.0)
        if has_weight:
            acc_lw_ref[...] += jnp.where(keep, loss * w, 0.0)
            acc_w_ref[...] += jnp.where(keep, w, 0.0)

    chunk = split * steps + step

    def tail_keep():
        # Drops the flat zero-pad and partial-last-block garbage rows.
        row = jax.lax.broadcasted_iota(jnp.int32, (block_r, _LANES), 0)
        ln = jax.lax.broadcasted_iota(jnp.int32, (block_r, _LANES), 1)
        flat = (chunk * block_r + row) * _LANES + ln
        return lane_keep & (flat < 4 * n_boxes)

    if not needs_tail_mask:
        accumulate(lane_keep)
    elif total_chunks == 1:
        accumulate(tail_keep())
    else:
        is_last = chunk == total_chunks - 1

        @pl.when(jnp.logical_not(is_last))
        def _():
            accumulate(lane_keep)

        @pl.when(is_last)
        def _():
            accumulate(tail_keep())

    @pl.when(step == steps - 1)
    def _():
        out_ref[:, 0:1, :] = jnp.sum(acc_l_ref[...], axis=0, keepdims=True)[None]
        if has_weight:
            out_ref[:, 1:2, :] = jnp.sum(acc_lw_ref[...], axis=0,
                                         keepdims=True)[None]
            out_ref[:, 2:3, :] = jnp.sum(acc_w_ref[...], axis=0,
                                         keepdims=True)[None]


@functools.partial(jax.jit, static_argnames=('loc_loss_type', 'max_block_rows'))
def iou_loss(out, target, weight=None, *, loc_loss_type='iou',
             max_block_rows=_MAX_BLOCK_ROWS):
    """Pallas equivalent of IOULoss(loc_loss_type)(out, target, weight)."""
    if loc_loss_type not in ('iou', 'giou'):
        raise ValueError(f"unknown loc_loss_type: {loc_loss_type}")
    n = out.shape[0]
    assert out.shape == (n, 4) and target.shape == (n, 4)
    has_weight = weight is not None
    if has_weight:
        assert weight.shape == (n,)

    total = 4 * n
    m = _cdiv(total, _LANES)          # rows of the interleaved (m, 128) plane
    pad = m * _LANES - total          # 0 when 4*n is a multiple of 128

    def to_plane(a):
        flat = a.reshape(-1)          # free (row-major flatten)
        if pad:
            flat = jnp.pad(flat, (0, pad))   # single contiguous copy, no transpose
        return flat.reshape(m, _LANES)       # free

    pred_plane = to_plane(out)
    targ_plane = to_plane(target)

    # Block row count: full array when it fits (always legal), otherwise a
    # large cap rounded to the dtype's sublane packing (8/16/32 rows).
    arrs = [out, target] + ([weight] if has_weight else [])
    row_align = max(max(8, 32 // jnp.dtype(a.dtype).itemsize) for a in arrs)
    if m <= max_block_rows:
        block_r = m
    else:
        block_r = max(row_align, (max_block_rows // row_align) * row_align)

    total_chunks = _cdiv(m, block_r)
    # 2-way split of the chunk axis (used by 2-TC chips; a cheap sequential
    # outer loop on 1-TC chips).  Only when it divides evenly so every block
    # index stays in range.
    n_split = 2 if (total_chunks >= 2 and total_chunks % 2 == 0) else 1
    steps = total_chunks // n_split
    needs_tail_mask = (pad > 0) or (m % block_r != 0)

    kernel = functools.partial(
        _iou_loss_kernel, loc_loss_type=loc_loss_type, block_r=block_r,
        steps=steps, total_chunks=total_chunks, n_boxes=n,
        needs_tail_mask=needs_tail_mask, has_weight=has_weight)

    box_spec = pl.BlockSpec((block_r, _LANES), lambda c, i: (c * steps + i, 0))

    in_specs = [box_spec, box_spec]
    inputs = [pred_plane, targ_plane]
    scratch = [pltpu.VMEM((block_r, _LANES), jnp.float32)]
    rows_out = 1
    if has_weight:
        # Spread weight over the 4 coordinate lanes so it aligns with the
        # interleaved loss plane; also lets sum(weight) be computed in-kernel.
        w_plane = to_plane(jnp.broadcast_to(weight.reshape(n, 1), (n, 4)))
        in_specs.append(box_spec)
        inputs.append(w_plane)
        scratch += [pltpu.VMEM((block_r, _LANES), jnp.float32),
                    pltpu.VMEM((block_r, _LANES), jnp.float32)]
        rows_out = 3

    partials = pl.pallas_call(
        kernel,
        out_shape=jax.ShapeDtypeStruct((n_split, rows_out, _LANES), jnp.float32),
        grid=(n_split, steps),
        in_specs=in_specs,
        out_specs=pl.BlockSpec((1, rows_out, _LANES), lambda c, i: (c, 0, 0)),
        scratch_shapes=scratch,
        compiler_params=pltpu.CompilerParams(
            dimension_semantics=("parallel", "arbitrary")),
    )(*inputs)

    # Tiny glue: one fused reduce over (n_split, rows_out, 128) + scalar math.
    sums = jnp.sum(partials, axis=(0, 2))
    mean_loss = sums[0] / n
    if not has_weight:
        return mean_loss
    sum_lw, sum_w = sums[1], sums[2]
    safe_w = jnp.where(sum_w > 0, sum_w, 1.0)   # dead branch must not NaN
    return jnp.where(sum_w > 0, sum_lw / safe_w, mean_loss)


def _reference(out, target, weight, loc_loss_type):
    """Pure-JAX reference mirroring the PyTorch forward."""
    pl_, pt_, pr_, pb_ = [out[:, i] for i in range(4)]
    tl_, tt_, tr_, tb_ = [target[:, i] for i in range(4)]
    target_area = (tl_ + tr_) * (tt_ + tb_)
    pred_area = (pl_ + pr_) * (pt_ + pb_)
    w_i = jnp.minimum(pl_, tl_) + jnp.minimum(pr_, tr_)
    h_i = jnp.minimum(pb_, tb_) + jnp.minimum(pt_, tt_)
    area_i = w_i * h_i
    area_u = target_area + pred_area - area_i
    ious = (area_i + 1.0) / (area_u + 1.0)
    if loc_loss_type == 'iou':
        loss = -jnp.log(ious)
    else:
        g_w = jnp.maximum(pl_, tl_) + jnp.maximum(pr_, tr_)
        g_h = jnp.maximum(pb_, tb_) + jnp.maximum(pt_, tt_)
        g_i = g_w * g_h + 1e-07
        gious = ious - (g_i - area_u) / g_i
        loss = 1.0 - gious
    if weight is not None:
        w_sum = weight.sum()
        return jnp.where(w_sum > 0,
                         (loss * weight).sum() / jnp.where(w_sum > 0, w_sum, 1.0),
                         loss.mean())
    return loss.mean()


if __name__ == "__main__":
    key = jax.random.PRNGKey(0)

    def run_case(n_boxes, loc_loss_type, with_weight, max_block_rows):
        k1, k2, k3 = jax.random.split(jax.random.fold_in(key, n_boxes), 3)
        # FCOS-style non-negative l,t,r,b distances.
        out = jax.random.uniform(k1, (n_boxes, 4), jnp.float32, 0.0, 10.0)
        target = jax.random.uniform(k2, (n_boxes, 4), jnp.float32, 0.0, 10.0)
        weight = (jax.random.uniform(k3, (n_boxes,), jnp.float32, 0.0, 1.0)
                  if with_weight else None)
        got = jax.block_until_ready(
            iou_loss(out, target, weight, loc_loss_type=loc_loss_type,
                     max_block_rows=max_block_rows))
        want = _reference(out, target, weight, loc_loss_type)
        good = bool(jnp.allclose(got, want, rtol=1e-4, atol=1e-5))
        if not good:
            print(f"MISMATCH n={n_boxes} {loc_loss_type} "
                  f"weight={with_weight} blk={max_block_rows}: {got} vs {want}")
        return good

    ok = True
    # Small single-chunk cases (n=200 is deliberately not a multiple of 32,
    # exercising the flat pad + tail mask).
    for llt in ('iou', 'giou'):
        for with_w in (False, True):
            ok &= run_case(200, llt, with_w, _MAX_BLOCK_ROWS)
    # Small multi-chunk cases (forces 4 chunks, 2-way split, partial last
    # block) by capping the block row count.
    ok &= run_case(2000, 'giou', True, 16)
    ok &= run_case(2000, 'iou', False, 16)

    if ok:
        print("KERNEL_OK")
</pallas_src>

<mosaic_0001>
module attributes {stable_mosaic.version = 11 : i64} {
  func.func @_iou_loss_kernel(%arg0: i32, %arg1: i32, %arg2: memref<7x128xf32, #tpu.memory_space<vmem>>, %arg3: memref<7x128xf32, #tpu.memory_space<vmem>>, %arg4: memref<1x1x128xf32, #tpu.memory_space<vmem>>, %arg5: memref<7x128xf32, #tpu.memory_space<vmem>>) attributes {dimension_semantics = [#tpu.dimension_semantics<parallel>, #tpu.dimension_semantics<arbitrary>], iteration_bounds = array<i64: 1, 1>, scalar_prefetch = 0 : i64, scratch_operands = 1 : i64, tpu.core_type = #tpu.core_type<tc>, window_params = [{transform_indices = @transform_0, window_bounds = array<i64: 7, 128>}, {transform_indices = @transform_1, window_bounds = array<i64: 7, 128>}, {transform_indices = @transform_2, window_bounds = array<i64: 1, 1, 128>}]} {
    %c0_i32 = arith.constant 0 : i32
    %0 = arith.cmpi eq, %arg1, %c0_i32 : i32
    %1 = arith.extui %0 : i1 to i32
    %c0_i32_0 = arith.constant 0 : i32
    %2 = arith.cmpi ne, %1, %c0_i32_0 : i32
    scf.if %2 {
      %cst_19 = arith.constant 0.000000e+00 : f32
      %61 = vector.broadcast %cst_19 : f32 to vector<7x128xf32>
      %c0_20 = arith.constant 0 : index
      %c0_21 = arith.constant 0 : index
      %62 = vector.load %arg5[%c0_20, %c0_21] : memref<7x128xf32, #tpu.memory_space<vmem>>, vector<7x128xf32>
      tpu.vector_store %arg5[%c0_20, %c0_21], %61 {strides = array<i32>} : memref<7x128xf32, #tpu.memory_space<vmem>>, vector<7x128xf32>,
    } else {
    }
    %c0 = arith.constant 0 : index
    %c0_1 = arith.constant 0 : index
    %3 = vector.load %arg2[%c0, %c0_1] : memref<7x128xf32, #tpu.memory_space<vmem>>, vector<7x128xf32>
    %c0_2 = arith.constant 0 : index
    %c0_3 = arith.constant 0 : index
    %4 = vector.load %arg3[%c0_2, %c0_3] : memref<7x128xf32, #tpu.memory_space<vmem>>, vector<7x128xf32>
    %c126_i32 = arith.constant 126 : i32
    %5 = tpu.dynamic_rotate %3 by %c126_i32 dim 1 : vector<7x128xf32>, i32 -> vector<7x128xf32>
    %6 = arith.addf %3, %5 : vector<7x128xf32>
    %c126_i32_4 = arith.constant 126 : i32
    %7 = tpu.dynamic_rotate %4 by %c126_i32_4 dim 1 : vector<7x128xf32>, i32 -> vector<7x128xf32>
    %8 = arith.addf %4, %7 : vector<7x128xf32>
    %9 = arith.minimumf %3, %4 : vector<7x128xf32>
    %c126_i32_5 = arith.constant 126 : i32
    %10 = tpu.dynamic_rotate %9 by %c126_i32_5 dim 1 : vector<7x128xf32>, i32 -> vector<7x128xf32>
    %11 = arith.addf %9, %10 : vector<7x128xf32>
    %c127_i32 = arith.constant 127 : i32
    %12 = tpu.dynamic_rotate %6 by %c127_i32 dim 1 : vector<7x128xf32>, i32 -> vector<7x128xf32>
    %13 = arith.mulf %6, %12 : vector<7x128xf32>
    %c127_i32_6 = arith.constant 127 : i32
    %14 = tpu.dynamic_rotate %8 by %c127_i32_6 dim 1 : vector<7x128xf32>, i32 -> vector<7x128xf32>
    %15 = arith.mulf %8, %14 : vector<7x128xf32>
    %c127_i32_7 = arith.constant 127 : i32
    %16 = tpu.dynamic_rotate %11 by %c127_i32_7 dim 1 : vector<7x128xf32>, i32 -> vector<7x128xf32>
    %17 = arith.mulf %11, %16 : vector<7x128xf32>
    %18 = arith.addf %15, %13 : vector<7x128xf32>
    %19 = arith.subf %18, %17 : vector<7x128xf32>
    %cst = arith.constant 1.000000e+00 : f32
    %20 = vector.broadcast %cst : f32 to vector<7x128xf32>
    %21 = arith.addf %17, %20 : vector<7x128xf32>
    %cst_8 = arith.constant 1.000000e+00 : f32
    %22 = vector.broadcast %cst_8 : f32 to vector<7x128xf32>
    %23 = arith.addf %19, %22 : vector<7x128xf32>
    %24 = arith.divf %21, %23 : vector<7x128xf32>
    %25 = math.log %24 : vector<7x128xf32>
    %cst_9 = arith.constant 0.000000e+00 : f32
    %26 = vector.broadcast %cst_9 : f32 to vector<7x128xf32>
    %27 = arith.subf %26, %25 : vector<7x128xf32>
    %28 = tpu.iota {dimensions = array<i32: 1>} : vector<1x128xi32>
    %c2_i32 = arith.constant 2 : i32
    %29 = vector.broadcast %c2_i32 : i32 to vector<1x128xi32>
    %30 = arith.shrsi %28, %29 : vector<1x128xi32>
    %c127_i32_10 = arith.constant 127 : i32
    %31 = tpu.dynamic_rotate %30 by %c127_i32_10 dim 1 : vector<1x128xi32>, i32 -> vector<1x128xi32>
    %32 = arith.cmpi eq, %30, %31 : vector<1x128xi32>
    %c126_i32_11 = arith.constant 126 : i32
    %33 = tpu.dynamic_rotate %30 by %c126_i32_11 dim 1 : vector<1x128xi32>, i32 -> vector<1x128xi32>
    %34 = arith.cmpi eq, %30, %33 : vector<1x128xi32>
    %35 = arith.andi %32, %34 : vector<1x128xi1>
    %c125_i32 = arith.constant 125 : i32
    %36 = tpu.dynamic_rotate %30 by %c125_i32 dim 1 : vector<1x128xi32>, i32 -> vector<1x128xi32>
    %37 = arith.cmpi eq, %30, %36 : vector<1x128xi32>
    %38 = arith.andi %35, %37 : vector<1x128xi1>
    %c1_i32 = arith.constant 1 : i32
    %39 = arith.muli %arg0, %c1_i32 : i32
    %40 = arith.addi %39, %arg1 : i32
    %41 = tpu.iota {dimensions = array<i32: 0>} : vector<7x128xi32>
    %42 = tpu.iota {dimensions = array<i32: 1>} : vector<7x128xi32>
    %c7_i32 = arith.constant 7 : i32
    %43 = arith.muli %40, %c7_i32 : i32
    %44 = vector.broadcast %43 : i32 to vector<7x128xi32>
    %45 = arith.addi %44, %41 : vector<7x128xi32>
    %c128_i32 = arith.constant 128 : i32
    %46 = vector.broadcast %c128_i32 : i32 to vector<7x128xi32>
    %47 = arith.muli %45, %46 : vector<7x128xi32>
    %48 = arith.addi %47, %42 : vector<7x128xi32>
    %c800_i32 = arith.constant 800 : i32
    %49 = vector.broadcast %c800_i32 : i32 to vector<7x128xi32>
    %50 = arith.cmpi slt, %48, %49 : vector<7x128xi32>
    %51 = vector.broadcast %38 : vector<1x128xi1> to vector<7x128xi1>
    %52 = arith.andi %51, %50 : vector<7x128xi1>
    %c0_12 = arith.constant 0 : index
    %c0_13 = arith.constant 0 : index
    %53 = vector.load %arg5[%c0_12, %c0_13] : memref<7x128xf32, #tpu.memory_space<vmem>>, vector<7x128xf32>
    %cst_14 = arith.constant 0.000000e+00 : f32
    %54 = vector.broadcast %cst_14 : f32 to vector<7x128xf32>
    %55 = arith.select %52, %27, %54 : vector<7x128xi1>, vector<7x128xf32>
    %56 = arith.addf %53, %55 : vector<7x128xf32>
    %c0_15 = arith.constant 0 : index
    %c0_16 = arith.constant 0 : index
    %57 = vector.load %arg5[%c0_15, %c0_16] : memref<7x128xf32, #tpu.memory_space<vmem>>, vector<7x128xf32>
    tpu.vector_store %arg5[%c0_15, %c0_16], %56 {strides = array<i32>} : memref<7x128xf32, #tpu.memory_space<vmem>>, vector<7x128xf32>,
    %c0_i32_17 = arith.constant 0 : i32
    %58 = arith.cmpi eq, %arg1, %c0_i32_17 : i32
    %59 = arith.extui %58 : i1 to i32
    %c0_i32_18 = arith.constant 0 : i32
    %60 = arith.cmpi ne, %59, %c0_i32_18 : i32
    scf.if %60 {
      %c0_19 = arith.constant 0 : index
      %c0_20 = arith.constant 0 : index
      %61 = vector.load %arg5[%c0_19, %c0_20] : memref<7x128xf32, #tpu.memory_space<vmem>>, vector<7x128xf32>
      %cst_21 = arith.constant dense<0.000000e+00> : vector<128xf32>
      %62 = vector.multi_reduction <add>, %61, %cst_21 [0] : vector<7x128xf32> to vector<128xf32>
      %63 = vector.shape_cast %62 : vector<128xf32> to vector<1x128xf32>
      %64 = vector.shape_cast %63 : vector<1x128xf32> to vector<1x1x128xf32>
      %c0_22 = arith.constant 0 : index
      %c0_23 = arith.constant 0 : index
      %c0_24 = arith.constant 0 : index
      %65 = vector.load %arg4[%c0_22, %c0_23, %c0_24] : memref<1x1x128xf32, #tpu.memory_space<vmem>>, vector<1x1x128xf32>
      tpu.vector_store %arg4[%c0_22, %c0_23, %c0_24], %64 {strides = array<i32>} : memref<1x1x128xf32, #tpu.memory_space<vmem>>, vector<1x1x128xf32>,
    } else {
    }
    return
  }
  func.func @transform_0(%arg0: i32, %arg1: i32) -> (i32, i32) {
    %c1_i32 = arith.constant 1 : i32
    %0 = arith.muli %arg0, %c1_i32 : i32
    %1 = arith.addi %0, %arg1 : i32
    %c0_i32 = arith.constant 0 : i32
    %c0_i32_0 = arith.constant 0 : i32
    return %1, %c0_i32 : i32, i32
  }
  func.func @transform_1(%arg0: i32, %arg1: i32) -> (i32, i32) {
    %c1_i32 = arith.constant 1 : i32
    %0 = arith.muli %arg0, %c1_i32 : i32
    %1 = arith.addi %0, %arg1 : i32
    %c0_i32 = arith.constant 0 : i32
    %c0_i32_0 = arith.constant 0 : i32
    return %1, %c0_i32 : i32, i32
  }
  func.func @transform_2(%arg0: i32, %arg1: i32) -> (i32, i32, i32) {
    %c0_i32 = arith.constant 0 : i32
    %c0_i32_0 = arith.constant 0 : i32
    %c0_i32_1 = arith.constant 0 : i32
    return %arg0, %c0_i32, %c0_i32_0 : i32, i32, i32
  }
}

</mosaic_0001>

<llo_original>
// kernel: iou_loss.1
$region0: #{iou_loss.1}
  #allocation0 [shape = 'u32[]', space=smem, size = 0x4, offset = 0x4, fixed_abs, tag = 'smem constant byte address 0x4 - core index']
  #allocation1 [shape = 'u32[144,128]{1,0:T(1,128)}', space=vmem, size = 0x12000, scoped, tag = 'internal scratch']
  #allocation2 [shape = 'f32[7,128]{1,0:T(8,128)}', space=vmem, size = 0x1000, scoped, tag = 'scratch operand']
  %s0 = inlined_call_operand.vmem [shape: f32[7,128], index: 0, kind: input, shape index: {}]
  %s1 = inlined_call_operand.vmem [shape: f32[7,128], index: 1, kind: input, shape index: {}]
  %s2 = inlined_call_operand.vmem [shape: f32[1,1,128], index: 2, kind: output, shape index: {}]
  %s3 = sld [smem:[#allocation0]]
  $region26: #{iou_loss.1} parent=0
    _
  %s5 = ssub.s32 1, %s3
  %s6 = scalar_select 0, %s5, %s3
  // Predicated region
  $region2: #{iou_loss.1} parent=0 // pred_check
    _
  $region3: #{iou_loss.1} parent=0 // pred_check_branch
    %8 = sbr.rel (0) target = $region5
  $region4: #{iou_loss.1} parent=0 // pred_region
    %s9 = sadd.s32 0, 0
    %p10 = scmp.lt.s32.totalorder %s9, 0
    %s11 = scalar_select %p10, %s9, 0
    %s12 = smul.addr %s11, 8
    %s13 = scalar_lea.vmem %s0, %s12
    %s14 = sadd.s32 0, 0
  $region5: #{iou_loss.1} parent=0 // pred_fallthru
    _
  // Predicated region
  $region6: #{iou_loss.1} parent=0 // pred_check
    _
  $region7: #{iou_loss.1} parent=0 // pred_check_branch
    %16 = sbr.rel (0) target = $region9
  $region8: #{iou_loss.1} parent=0 // pred_region
    %s17 = sadd.s32 0, 0
    %p18 = scmp.lt.s32.totalorder %s17, 0
    %s19 = scalar_select %p18, %s17, 0
    %s20 = smul.addr %s19, 8
    %s21 = scalar_lea.vmem %s1, %s20
    %s22 = sadd.s32 0, 0
  $region9: #{iou_loss.1} parent=0 // pred_fallthru
    _
  %s23 = sadd.s32 0, 0
  %p24 = scmp.lt.s32.totalorder %s23, 0
  %s25 = scalar_select %p24, %s23, 0
  %s26 = smul.addr %s25, 8
  %s27 = scalar_lea.vmem %s0, %s26
  %s28 = sadd.s32 0, 0
  %p29 = scmp.lt.s32.totalorder %s28, 0
  %s30 = scalar_select %p29, %s28, 0
  %s31 = smul.addr %s30, 8
  %s32 = scalar_lea.vmem %s1, %s31
  %s33 = sadd.s32 0, 0
  %p34 = scmp.lt.s32.totalorder %s33, 0
  %s35 = scalar_select %p34, %s33, 0
  %s36 = smul.addr %s35, 8
  %s37 = scalar_lea.vmem %s0, %s36
  %s38 = sadd.s32 0, 0
  %s39 = sadd.s32 0, 0
  %p40 = scmp.lt.s32.totalorder %s39, 0
  %s41 = scalar_select %p40, %s39, 0
  %s42 = smul.addr %s41, 8
  %s43 = scalar_lea.vmem %s1, %s42
  %s44 = sadd.s32 0, 0
  %p45 = scmp.eq.s32.totalorder 0, 0
  // Predicated region
  $region10: #{iou_loss.1} parent=0 // pred_check
    %p46 = pneg %p45
  $region11: #{iou_loss.1} parent=0 // pred_check_branch
    %48 = sbr.rel (%p46) target = $region13
  $region12: #{iou_loss.1} parent=0 // pred_region
    %49 = vst [vmem:[#allocation2] sm:$0x7f] 0.0
  $region13: #{iou_loss.1} parent=0 // pred_fallthru
    _
  %v50 = vld [vmem:[%s37] sm:$0x7f]
  %v51 = vld [vmem:[%s43] sm:$0x7f]
  %52 = vrot.lane.b32.xlu0 %v50, 126
  %v53 = vpop.permute.xlu0 %52
  %v54 = vadd.f32 %v50, %v53
  %55 = vrot.lane.b32.xlu0 %v51, 126
  %v56 = vpop.permute.xlu0 %55
  %v57 = vadd.f32 %v51, %v56
  %v58 = vmin.f32 %v50, %v51
  %59 = vrot.lane.b32.xlu0 %v58, 126
  %v60 = vpop.permute.xlu0 %59
  %v61 = vadd.f32 %v58, %v60
  %62 = vrot.lane.b32.xlu0 %v54, 127
  %v63 = vpop.permute.xlu0 %62
  %v64 = vmul.f32 %v54, %v63
  %65 = vrot.lane.b32.xlu0 %v57, 127
  %v66 = vpop.permute.xlu0 %65
  %v67 = vmul.f32 %v57, %v66
  %68 = vrot.lane.b32.xlu0 %v61, 127
  %v69 = vpop.permute.xlu0 %68
  %v70 = vmul.f32 %v61, %v69
  %v71 = vadd.f32 %v67, %v64
  %v72 = vsub.f32 %v71, %v70
  %v73 = vadd.f32 %v70, 1.0
  %v74 = vadd.f32 %v72, 1.0
  %v75 = vrcp.pop %v74
  %v76 = vmul.f32 %v73, %v75
  %v77 = vlog2.pop %v76
  %v78 = vmul.f32 %v77, 0.6931472
  %v79 = vsub.f32 0.0, %v78
  %v80 = vlaneseq
  %v81 = vand.u32 %v80, 127
  %v82 = vshra.s32 %v81, 2
  %83 = vrot.lane.b32.xlu0 %v82, 127
  %v84 = vpop.permute.xlu0 %83
  %vm85 = vcmp.eq.s32.totalorder %v82, %v84
  %86 = vrot.lane.b32.xlu0 %v82, 126
  %v87 = vpop.permute.xlu0 %86
  %vm88 = vcmp.eq.s32.totalorder %v82, %v87
  %vm89 = vmand %vm85, %vm88
  %90 = vrot.lane.b32.xlu0 %v82, 125
  %v91 = vpop.permute.xlu0 %90
  %vm92 = vcmp.eq.s32.totalorder %v82, %v91
  %vm93 = vmand %vm89, %vm92
  %s94 = sadd.s32 0, 0
  %v95 = vlaneseq
  %v96 = vshrl.u32 %v95, 7
  %s97 = smul.u32 %s94, 7
  %v98 = vstv %s97
  %v99 = vadd.s32 %v98, %v96
  %v100 = vmul.u32 %v99, 128
  %v101 = vadd.s32 %v100, %v81
  %vm102 = vcmp.lt.s32.totalorder %v101, 800
  %v103 = vsel %vm93, 1, 0
  %v104 = vlaneseq
  %v105 = vshrl.u32 %v104, 7
  %v106 = vsub.s32 0, %v105
  %v107 = vrot.slane %v103, %v106
  %vm108 = vcmp.eq.s32.totalorder %v107, 1
  %vm109 = vmand %vm108, %vm102
  %v110 = vld [vmem:[#allocation2] sm:$0x7f]
  %v111 = vsel %vm109, %v79, 0.0
  %v112 = vadd.f32 %v110, %v111
  %113 = vst [vmem:[#allocation2] sm:$0x7f] %v112
  // Predicated region
  $region14: #{iou_loss.1} parent=0 // pred_check
    %p114 = pneg %p45
  $region15: #{iou_loss.1} parent=0 // pred_check_branch
    %116 = sbr.rel (%p114) target = $region17
  $region16: #{iou_loss.1} parent=0 // pred_region
    %v117 = vld [vmem:[#allocation2] sm:$0x7f]
    %vm118 = vcmask 1046528
    %v119 = vsel %vm118, %v117, 0.0
    %v120 = vrot.slane %v119, 4
    %v121 = vadd.f32 %v119, %v120
    %v122 = vrot.slane %v121, 2
    %v123 = vadd.f32 %v121, %v122
    %v124 = vrot.slane %v123, 1
    %v125 = vadd.f32 %v123, %v124
    %126 = vst [vmem:[%s2] sm:$0x1] %v125
  $region17: #{iou_loss.1} parent=0 // pred_fallthru
    _
  // Predicated region
  $region18: #{iou_loss.1} parent=0 // pred_check
    _
  $region19: #{iou_loss.1} parent=0 // pred_check_branch
    %128 = sbr.rel (0) target = $region21
  $region20: #{iou_loss.1} parent=0 // pred_region
    _
  $region21: #{iou_loss.1} parent=0 // pred_fallthru
    _
  // Predicated region
  $region22: #{iou_loss.1} parent=0 // pred_check
    _
  $region23: #{iou_loss.1} parent=0 // pred_check_branch
    %130 = sbr.rel (0) target = $region25
  $region24: #{iou_loss.1} parent=0 // pred_region
    _
  $region25: #{iou_loss.1} parent=0 // pred_fallthru
    _

</llo_original>
